<compile_context>
chip_gen: v5e
topology: v5e:2x2
jax: 0.10.0
libtpu: 0.0.40
codegen_flags: <defaults>
</compile_context>

<pallas_src>
import jax
import jax.numpy as jnp
from jax.experimental import pallas as pl
from jax.experimental.pallas import tpu as pltpu


def _round_up(x, m):
    return ((x + m - 1) // m) * m


def _cdiv(a, b):
    return (a + b - 1) // b


def attn_pool_kernel(h_ref, qb_ref, e_ref, w_ref, o_ref):
    """One batch tile on the lane-dense [TILE_B, L*H] layout.

      scores = h2d @ Qblock              (MXU)            [TILE_B, L]
      p      = softmax(scores)           (VPU/EUP, f32, exact division)
      p_exp  = p @ E                     (MXU)            [TILE_B, L*H]
      out    = (h2d * p_exp) @ Wtile     (VPU mul + MXU)  [TILE_B, F_pad]
    """
    h2d = h_ref[...]                                                    # input dtype, no upcast
    scores = jnp.dot(h2d, qb_ref[...], preferred_element_type=jnp.float32)   # [TILE_B, L]

    # Softmax over layers, f32, exact division (denominator is only [TILE_B, 1]).
    m = jnp.max(scores, axis=-1, keepdims=True)
    ex = jnp.exp(scores - m)
    p = ex / jnp.sum(ex, axis=-1, keepdims=True)                        # [TILE_B, L] f32

    # Expand per-layer weights to per-element weights with a tiny MXU matmul
    # (avoids an in-kernel reshape/repeat relayout).
    p_exp = jnp.dot(p, e_ref[...], preferred_element_type=jnp.float32)  # [TILE_B, L*H]

    # Fused weighted-sum + projection: one big MXU matmul against the row-tiled weight.
    x = (h2d.astype(jnp.float32) * p_exp).astype(h2d.dtype)
    o_ref[...] = jnp.dot(
        x, w_ref[...], preferred_element_type=jnp.float32
    ).astype(o_ref.dtype)


def _pick_tile_b(batch, lh_pad, f_pad, num_layers, h_esize,
                 budget_bytes=20 * 1024 * 1024, max_tile=1024):
    """Largest batch tile (multiple of 8) whose VMEM footprint fits the budget.

    Uses *padded* VMEM tile shapes ((8,128) rounding) and the actual input element size,
    plus an allowance for in-kernel f32 temporaries (review fix).
    """
    b_pad8 = _round_up(batch, 8)
    tb = min(max_tile, b_pad8)
    l_lanes = _round_up(num_layers, 128)   # lane padding of the [LH, L] block-diag q matrix
    l_sub = _round_up(num_layers, 8)       # sublane padding of the [L, LH] expansion matrix

    def need(t):
        h_blocks = 2 * t * lh_pad * h_esize                 # double-buffered h blocks
        out_blocks = 2 * t * f_pad * 4                      # double-buffered f32 out blocks
        resident = (lh_pad * l_lanes * h_esize              # Qblock (VMEM-resident)
                    + l_sub * lh_pad * 4                    # E      (VMEM-resident, f32)
                    + lh_pad * f_pad * h_esize)             # Wtile  (VMEM-resident)
        temps = 3 * t * lh_pad * 4                          # in-kernel f32 temporaries
        return h_blocks + out_blocks + resident + temps

    while tb > 8 and need(tb) > budget_bytes:
        tb = max(8, _round_up(tb // 2, 8))

    # Guarantee >= 2 grid steps whenever the batch allows it: lets v7x's second
    # TensorCore participate and restores DMA/compute overlap on all generations.
    if b_pad8 >= 16:
        tb = min(tb, max(8, _round_up(_cdiv(b_pad8, 2), 8)))
    return tb


def attention_pooling_forward(all_hidden_states, q, w_h, num_layers, hidden_size):
    L, H = num_layers, hidden_size

    # Host-side CLS gather: slice [:, 0, :] FIRST, then one stack along the last axis.
    cls_stack = jnp.stack(
        [hs[:, 0, :] for hs in all_hidden_states[1:L + 1]], axis=-1
    )                                                       # [B, H, L]
    B = cls_stack.shape[0]

    # torch's .view(-1, L, H) of the [B, H, L] stack is a raw row-major reinterpret, so
    # flattening per batch row gives the identical bytes: h[b, l, i] == h2d[b, l*H + i].
    LH = L * H
    h2d = cls_stack.reshape(B, LH)
    dt = h2d.dtype
    esize = jnp.dtype(dt).itemsize

    F_in = w_h.shape[1]
    F_pad = _round_up(F_in, 128)          # lane-dense output -> unmasked vector stores
    LH_pad = _round_up(LH, 128)           # lane-dense h rows -> contiguous DMA bursts

    # Parameter-derived matrices (tiny, built once on the host, VMEM-resident in-kernel):
    #   Qblock[l*H + i, l] = q[0, i]    -> scores = h2d @ Qblock        (MXU)
    #   E     [l, l*H + i] = 1          -> p_exp  = p   @ E             (MXU)
    #   Wtile [l*H + i, f] = w_h[i, f]  -> fused pool+proj: (h2d*p_exp) @ Wtile
    q_block = jnp.kron(jnp.eye(L, dtype=dt), q.astype(dt).reshape(H, 1))            # [LH, L]
    expand = jnp.kron(jnp.eye(L, dtype=jnp.float32), jnp.ones((1, H), jnp.float32))  # [L, LH]
    w_tile = jnp.tile(w_h.astype(dt), (L, 1))                                        # [LH, F]
    if F_pad != F_in:
        w_tile = jnp.pad(w_tile, ((0, 0), (0, F_pad - F_in)))
    if LH_pad != LH:
        h2d = jnp.pad(h2d, ((0, 0), (0, LH_pad - LH)))
        q_block = jnp.pad(q_block, ((0, LH_pad - LH), (0, 0)))
        expand = jnp.pad(expand, ((0, 0), (0, LH_pad - LH)))
        w_tile = jnp.pad(w_tile, ((0, LH_pad - LH), (0, 0)))

    # VMEM-budgeted batch tile; pad B so the grid divides evenly (padded rows sliced off).
    TILE_B = _pick_tile_b(B, LH_pad, F_pad, L, esize)
    B_pad = _round_up(B, TILE_B)
    if B_pad != B:
        h2d = jnp.pad(h2d, ((0, B_pad - B), (0, 0)))

    out = pl.pallas_call(
        attn_pool_kernel,
        out_shape=jax.ShapeDtypeStruct((B_pad, F_pad), jnp.float32),
        grid=(B_pad // TILE_B,),
        in_specs=[
            pl.BlockSpec((TILE_B, LH_pad), lambda i: (i, 0)),   # streamed / double-buffered
            pl.BlockSpec((LH_pad, L), lambda i: (0, 0)),        # VMEM-resident across grid
            pl.BlockSpec((L, LH_pad), lambda i: (0, 0)),        # VMEM-resident across grid
            pl.BlockSpec((LH_pad, F_pad), lambda i: (0, 0)),    # VMEM-resident across grid
        ],
        out_specs=pl.BlockSpec((TILE_B, F_pad), lambda i: (i, 0)),
        compiler_params=pltpu.CompilerParams(
            dimension_semantics=("parallel",),                  # megacore: TCs split batch
            vmem_limit_bytes=32 * 1024 * 1024,                  # safe on v5e/v6e/v7x
        ),
    )(h2d, q_block, expand, w_tile)

    # dropout(p=0.1) is identity in eval mode.
    # TODO(synk): training-mode dropout (RNG mask) not implemented.
    return out[:B, :F_in]


def reference_forward(all_hidden_states, q, w_h, num_layers, hidden_size):
    """Pure-JAX reference mirroring the PyTorch module line by line."""
    cls_stack = jnp.stack(
        [all_hidden_states[i][:, 0] for i in range(1, num_layers + 1)], axis=-1
    )                                                           # [B, H, L]
    h = cls_stack.reshape(-1, num_layers, hidden_size)          # torch .view (reinterpret)
    v = jnp.matmul(q, jnp.swapaxes(h, -2, -1)).squeeze(1)       # [B, L]
    v = jax.nn.softmax(v, axis=-1)
    v_temp = jnp.swapaxes(jnp.matmul(v[:, None, :], h), -2, -1) # [B, H, 1]
    out = jnp.matmul(w_h.T, v_temp).squeeze(2)                  # [B, F]
    return out


if __name__ == "__main__":
    num_layers = 8      # num_hidden_layers
    hidden_size = 32
    hiddendim_fc = 64
    batch = 2
    seq = 8

    key = jax.random.PRNGKey(0)
    k_hs, k_q, k_w = jax.random.split(key, 3)

    # all_hidden_states: tuple of (num_layers + 1) tensors, each [batch, seq, hidden]
    hs_keys = jax.random.split(k_hs, num_layers + 1)
    all_hidden_states = tuple(
        jax.random.normal(hs_keys[i], (batch, seq, hidden_size), dtype=jnp.float32)
        for i in range(num_layers + 1)
    )

    # parameters: N(0, 0.1) as in the module's __init__
    q = 0.1 * jax.random.normal(k_q, (1, hidden_size), dtype=jnp.float32)
    w_h = 0.1 * jax.random.normal(k_w, (hidden_size, hiddendim_fc), dtype=jnp.float32)

    out = attention_pooling_forward(all_hidden_states, q, w_h, num_layers, hidden_size)
    out = jax.block_until_ready(out)

    ref = reference_forward(all_hidden_states, q, w_h, num_layers, hidden_size)
    assert out.shape == (batch, hiddendim_fc)
    # Exact softmax division restores tight numerics (was 1e-4 with the approx reciprocal).
    assert jnp.allclose(out, ref, atol=2e-5, rtol=2e-5), "mismatch vs reference"

    print("KERNEL_OK")
</pallas_src>

<mosaic_0001>
module attributes {stable_mosaic.version = 11 : i64} {
  func.func @attn_pool_kernel(%arg0: i32, %arg1: memref<8x256xf32, #tpu.memory_space<vmem>>, %arg2: memref<256x8xf32, #tpu.memory_space<vmem>>, %arg3: memref<8x256xf32, #tpu.memory_space<vmem>>, %arg4: memref<256x128xf32, #tpu.memory_space<vmem>>, %arg5: memref<8x128xf32, #tpu.memory_space<vmem>>) attributes {dimension_semantics = [#tpu.dimension_semantics<parallel>], iteration_bounds = array<i64: 1>, scalar_prefetch = 0 : i64, scratch_operands = 0 : i64, tpu.core_type = #tpu.core_type<tc>, window_params = [{transform_indices = @transform_0, window_bounds = array<i64: 8, 256>}, {pipeline_mode = #tpu.pipeline_mode<synchronous>, transform_indices = @transform_1, window_bounds = array<i64: 256, 8>}, {pipeline_mode = #tpu.pipeline_mode<synchronous>, transform_indices = @transform_2, window_bounds = array<i64: 8, 256>}, {pipeline_mode = #tpu.pipeline_mode<synchronous>, transform_indices = @transform_3, window_bounds = array<i64: 256, 128>}, {transform_indices = @transform_4, window_bounds = array<i64: 8, 128>}]} {
    %c0 = arith.constant 0 : index
    %c0_0 = arith.constant 0 : index
    %0 = vector.load %arg1[%c0, %c0_0] : memref<8x256xf32, #tpu.memory_space<vmem>>, vector<8x256xf32>
    %c0_1 = arith.constant 0 : index
    %c0_2 = arith.constant 0 : index
    %1 = vector.load %arg2[%c0_1, %c0_2] : memref<256x8xf32, #tpu.memory_space<vmem>>, vector<256x8xf32>
    %cst = arith.constant dense<0.000000e+00> : vector<8x8xf32>
    %2 = tpu.matmul %0, %1, %cst {dimension_numbers = #tpu.dot_dimension_numbers<[1], [0], [0], [1], [0, 0, 1, 1], [], []>} : vector<8x256xf32>, vector<256x8xf32>, vector<8x8xf32> -> vector<8x8xf32>
    %cst_3 = arith.constant dense<0xFF800000> : vector<8xf32>
    %3 = vector.multi_reduction <maximumf>, %2, %cst_3 [1] : vector<8x8xf32> to vector<8xf32>
    %4 = vector.shape_cast %3 : vector<8xf32> to vector<8x1xf32>
    %5 = vector.broadcast %4 : vector<8x1xf32> to vector<8x8xf32>
    %6 = arith.subf %2, %5 : vector<8x8xf32>
    %7 = math.exp %6 : vector<8x8xf32>
    %cst_4 = arith.constant dense<0.000000e+00> : vector<8xf32>
    %8 = vector.multi_reduction <add>, %7, %cst_4 [1] : vector<8x8xf32> to vector<8xf32>
    %9 = vector.shape_cast %8 : vector<8xf32> to vector<8x1xf32>
    %10 = vector.broadcast %9 : vector<8x1xf32> to vector<8x8xf32>
    %11 = arith.divf %7, %10 : vector<8x8xf32>
    %c0_5 = arith.constant 0 : index
    %c0_6 = arith.constant 0 : index
    %12 = vector.load %arg3[%c0_5, %c0_6] : memref<8x256xf32, #tpu.memory_space<vmem>>, vector<8x256xf32>
    %cst_7 = arith.constant dense<0.000000e+00> : vector<8x256xf32>
    %13 = tpu.matmul %11, %12, %cst_7 {dimension_numbers = #tpu.dot_dimension_numbers<[1], [0], [0], [1], [0, 0, 1, 1], [], []>} : vector<8x8xf32>, vector<8x256xf32>, vector<8x256xf32> -> vector<8x256xf32>
    %14 = arith.mulf %0, %13 : vector<8x256xf32>
    %c0_8 = arith.constant 0 : index
    %c0_9 = arith.constant 0 : index
    %15 = vector.load %arg4[%c0_8, %c0_9] : memref<256x128xf32, #tpu.memory_space<vmem>>, vector<256x128xf32>
    %cst_10 = arith.constant dense<0.000000e+00> : vector<8x128xf32>
    %16 = tpu.matmul %14, %15, %cst_10 {dimension_numbers = #tpu.dot_dimension_numbers<[1], [0], [0], [1], [0, 0, 1, 1], [], []>} : vector<8x256xf32>, vector<256x128xf32>, vector<8x128xf32> -> vector<8x128xf32>
    %c0_11 = arith.constant 0 : index
    %c0_12 = arith.constant 0 : index
    %17 = vector.load %arg5[%c0_11, %c0_12] : memref<8x128xf32, #tpu.memory_space<vmem>>, vector<8x128xf32>
    tpu.vector_store %arg5[%c0_11, %c0_12], %16 {strides = array<i32>} : memref<8x128xf32, #tpu.memory_space<vmem>>, vector<8x128xf32>,
    return
  }
  func.func @transform_0(%arg0: i32) -> (i32, i32) {
    %c0_i32 = arith.constant 0 : i32
    %c0_i32_0 = arith.constant 0 : i32
    return %arg0, %c0_i32 : i32, i32
  }
  func.func @transform_1(%arg0: i32) -> (i32, i32) {
    %c0_i32 = arith.constant 0 : i32
    %c0_i32_0 = arith.constant 0 : i32
    %c0_i32_1 = arith.constant 0 : i32
    return %c0_i32, %c0_i32_0 : i32, i32
  }
  func.func @transform_2(%arg0: i32) -> (i32, i32) {
    %c0_i32 = arith.constant 0 : i32
    %c0_i32_0 = arith.constant 0 : i32
    %c0_i32_1 = arith.constant 0 : i32
    return %c0_i32, %c0_i32_0 : i32, i32
  }
  func.func @transform_3(%arg0: i32) -> (i32, i32) {
    %c0_i32 = arith.constant 0 : i32
    %c0_i32_0 = arith.constant 0 : i32
    %c0_i32_1 = arith.constant 0 : i32
    return %c0_i32, %c0_i32_0 : i32, i32
  }
  func.func @transform_4(%arg0: i32) -> (i32, i32) {
    %c0_i32 = arith.constant 0 : i32
    %c0_i32_0 = arith.constant 0 : i32
    return %arg0, %c0_i32 : i32, i32
  }
}

</mosaic_0001>

<llo_original>
// kernel: tpu_custom_call.1
$region0: #{tpu_custom_call.1}
  #allocation0 [shape = 'u32[]', space=smem, size = 0x4, offset = 0x4, fixed_abs, tag = 'smem constant byte address 0x4 - core index']
  #allocation1 [shape = 'u32[72,128]{1,0:T(1,128)}', space=vmem, size = 0x9000, scoped, tag = 'internal scratch']
  %s0 = inlined_call_operand.vmem [shape: f32[8,256], index: 0, kind: input, shape index: {}]
  %s1 = inlined_call_operand.vmem [shape: f32[256,8], index: 1, kind: input, shape index: {}]
  %s2 = inlined_call_operand.hbm [shape: f32[8,256], index: 2, kind: input, shape index: {}]
  %s3 = inlined_call_operand.vmem [shape: f32[256,128], index: 3, kind: input, shape index: {}]
  %s4 = inlined_call_operand.hbm [shape: f32[8,128], index: 4, kind: output, shape index: {}]
  %s5 = sld [smem:[#allocation0]]
  $region30: #{tpu_custom_call.1} parent=0
    _
  %s7 = ssub.s32 1, %s5
  %s8 = scalar_select 0, %s7, %s5
  $region1: #{tpu_custom_call.1} parent=0
    #allocation2 [shape = 'u8[8192]{0}', space=vmem, size = 0x2000, scoped, tag = 'input window, operand 2, single buffered']
    #allocation3 [shape = 's32[1]{0}', space=sflag, size = 0x4, scoped, tag = 'scoped memory for tpu_custom_call.1']
    #allocation4 [shape = 's32[1]{0}', space=sflag, size = 0x4, scoped, tag = 'scoped memory for tpu_custom_call.1']
    #allocation5 [shape = 'u8[4096]{0}', space=vmem, size = 0x1000, scoped, tag = 'output window, operand 0, single buffered']
    %9 = vsyncpa [#allocation3], 0
    %10 = vsyncpa [#allocation4], 0
    // Predicated region
    $region2: #{tpu_custom_call.1} parent=1 // pred_check
      _
    $region3: #{tpu_custom_call.1} parent=1 // pred_check_branch
      %12 = sbr.rel (0) target = $region5
    $region4: #{tpu_custom_call.1} parent=1 // pred_region
      _
    $region5: #{tpu_custom_call.1} parent=1 // pred_fallthru
      _
    // Predicated region
    $region6: #{tpu_custom_call.1} parent=1 // pred_check
      _
    $region7: #{tpu_custom_call.1} parent=1 // pred_check_branch
      %14 = sbr.rel (0) target = $region9
    $region8: #{tpu_custom_call.1} parent=1 // pred_region
      _
    $region9: #{tpu_custom_call.1} parent=1 // pred_fallthru
      _
    // Predicated region
    $region10: #{tpu_custom_call.1} parent=1 // pred_check
      _
    $region11: #{tpu_custom_call.1} parent=1 // pred_check_branch
      %16 = sbr.rel (0) target = $region13
    $region12: #{tpu_custom_call.1} parent=1 // pred_region
      %18 = vsyncadd [#allocation3], 0
      %s20 = sshll.u32 %s2, 4
      %s21 = int_to_ptr.hbm [resolvable:$true] %s20
      %s22 = sshll.u32 [#allocation2], 4
      %s23 = int_to_ptr.vmem [resolvable:$true] %s22
      %25 = dma.hbm_to_vmem [thread:$0]  %s21, 256, %s23, [#allocation3]
    $region13: #{tpu_custom_call.1} parent=1 // pred_fallthru
      _
    // Predicated region
    $region14: #{tpu_custom_call.1} parent=1 // pred_check
      _
    $region15: #{tpu_custom_call.1} parent=1 // pred_check_branch
      %27 = sbr.rel (0) target = $region17
    $region16: #{tpu_custom_call.1} parent=1 // pred_region
      _
    $region17: #{tpu_custom_call.1} parent=1 // pred_fallthru
      _
    // Predicated region
    $region18: #{tpu_custom_call.1} parent=1 // pred_check
      _
    $region19: #{tpu_custom_call.1} parent=1 // pred_check_branch
      %29 = sbr.rel (0) target = $region21
    $region20: #{tpu_custom_call.1} parent=1 // pred_region
      %31 = dma.done [#allocation3], 256
    $region21: #{tpu_custom_call.1} parent=1 // pred_fallthru
      _
    %v32 = vld [vmem:[%s0] sm:$0xff]
    %v33 = vld [vmem:[%s0 + $0x8] sm:$0xff]
    %v34 = vld [vmem:[%s1] sm:$0xff]
    %v35 = vld [vmem:[%s1 + $0x8] sm:$0xff]
    %v36 = vld [vmem:[%s1 + $0x10] sm:$0xff]
    %v37 = vld [vmem:[%s1 + $0x18] sm:$0xff]
    %v38 = vld [vmem:[%s1 + $0x20] sm:$0xff]
    %v39 = vld [vmem:[%s1 + $0x28] sm:$0xff]
    %v40 = vld [vmem:[%s1 + $0x30] sm:$0xff]
    %v41 = vld [vmem:[%s1 + $0x38] sm:$0xff]
    %v42 = vld [vmem:[%s1 + $0x40] sm:$0xff]
    %v43 = vld [vmem:[%s1 + $0x48] sm:$0xff]
    %v44 = vld [vmem:[%s1 + $0x50] sm:$0xff]
    %v45 = vld [vmem:[%s1 + $0x58] sm:$0xff]
    %v46 = vld [vmem:[%s1 + $0x60] sm:$0xff]
    %v47 = vld [vmem:[%s1 + $0x68] sm:$0xff]
    %v48 = vld [vmem:[%s1 + $0x70] sm:$0xff]
    %v49 = vld [vmem:[%s1 + $0x78] sm:$0xff]
    %v50 = vld [vmem:[%s1 + $0x80] sm:$0xff]
    %v51 = vld [vmem:[%s1 + $0x88] sm:$0xff]
    %v52 = vld [vmem:[%s1 + $0x90] sm:$0xff]
    %v53 = vld [vmem:[%s1 + $0x98] sm:$0xff]
    %v54 = vld [vmem:[%s1 + $0xa0] sm:$0xff]
    %v55 = vld [vmem:[%s1 + $0xa8] sm:$0xff]
    %v56 = vld [vmem:[%s1 + $0xb0] sm:$0xff]
    %v57 = vld [vmem:[%s1 + $0xb8] sm:$0xff]
    %v58 = vld [vmem:[%s1 + $0xc0] sm:$0xff]
    %v59 = vld [vmem:[%s1 + $0xc8] sm:$0xff]
    %v60 = vld [vmem:[%s1 + $0xd0] sm:$0xff]
    %v61 = vld [vmem:[%s1 + $0xd8] sm:$0xff]
    %v62 = vld [vmem:[%s1 + $0xe0] sm:$0xff]
    %v63 = vld [vmem:[%s1 + $0xe8] sm:$0xff]
    %v64 = vld [vmem:[%s1 + $0xf0] sm:$0xff]
    %v65 = vld [vmem:[%s1 + $0xf8] sm:$0xff]
    %66 = vmatpush.msra.mxu0 %v49
    %67 = vmatpush.msra.mxu0 %v48
    %68 = vmatpush.msra.mxu0 %v47
    %69 = vmatpush.msra.mxu0 %v46
    %70 = vmatpush.msra.mxu0 %v45
    %71 = vmatpush.msra.mxu0 %v44
    %72 = vmatpush.msra.mxu0 %v43
    %73 = vmatpush.msra.mxu0 %v42
    %74 = vmatpush.msra.mxu0 %v41
    %75 = vmatpush.msra.mxu0 %v40
    %76 = vmatpush.msra.mxu0 %v39
    %77 = vmatpush.msra.mxu0 %v38
    %78 = vmatpush.msra.mxu0 %v37
    %79 = vmatpush.msra.mxu0 %v36
    %80 = vmatpush.msra.mxu0 %v35
    %81 = vmatpush.msra.mxu0 %v34
    %82 = vmatmul.f32.gmra.mxu0 %v32
    %v83 = vpop.f32.mrf.mxu0
    %v84 = vadd.f32 0.0, %v83
    %85 = vdwg.mxu0
    %86 = vmatpush.msra.mxu0 %v65
    %87 = vmatpush.msra.mxu0 %v64
    %88 = vmatpush.msra.mxu0 %v63
    %89 = vmatpush.msra.mxu0 %v62
    %90 = vmatpush.msra.mxu0 %v61
    %91 = vmatpush.msra.mxu0 %v60
    %92 = vmatpush.msra.mxu0 %v59
    %93 = vmatpush.msra.mxu0 %v58
    %94 = vmatpush.msra.mxu0 %v57
    %95 = vmatpush.msra.mxu0 %v56
    %96 = vmatpush.msra.mxu0 %v55
    %97 = vmatpush.msra.mxu0 %v54
    %98 = vmatpush.msra.mxu0 %v53
    %99 = vmatpush.msra.mxu0 %v52
    %100 = vmatpush.msra.mxu0 %v51
    %101 = vmatpush.msra.mxu0 %v50
    %102 = vmatmul.f32.gmra.mxu0 %v33
    %v103 = vpop.f32.mrf.mxu0
    %v104 = vadd.f32 %v84, %v103
    %105 = vdwg.mxu0
    %vm106 = vcmask 64512
    %v107 = vsel %vm106, %v104, -inf
    %108 = vmax.xlane.f32.xlu0 %v107
    %v109 = vpop.xlane.xlu0 %108
    %v110 = vsub.f32 %v104, %v109
    %v111 = vmul.f32 %v110, 1.442695
    %v112 = vpow.pop %v111
    %v113 = vsel %vm106, %v112, 0.0
    %114 = vadd.xlane.f32.xlu0 %v113
    %v115 = vpop.xlane.xlu0 %114
    %v116 = vrcp.pop %v115
    %v117 = vmul.f32 %v115, %v116
    %v118 = vsub.f32 1.0, %v117
    %v119 = vmul.f32 %v116, %v118
    %v120 = vadd.f32 %v116, %v119
    %vm121 = vweird.f32 %v115
    %vm122 = vweird.f32 %v116
    %vm123 = vmor %vm121, %vm122
    %v124 = vsel %vm123, %v116, %v120
    %v125 = vand.u32 2147483647, %v115
    %vm126 = vcmp.eq.f32.partialorder %v125, 8.507059e+37
    %v127 = vand.u32 %v115, 2147483648
    %v128 = vor.u32 1.1754944e-38, %v127
    %v129 = vsel %vm126, %v128, %v124
    %v130 = vmul.f32 %v112, %v129
    %v131 = vld [vmem:[#allocation2] sm:$0xff]
    %v132 = vld [vmem:[#allocation2 + $0x8] sm:$0xff]
    %v134 = vsel %vm106, %v130, 0
    %136 = vmatpush.msra.mxu0 0.0
    %137 = vmatpush.msra.mxu0 0.0
    %138 = vmatpush.msra.mxu0 0.0
    %139 = vmatpush.msra.mxu0 0.0
    %140 = vmatpush.msra.mxu0 0.0
    %141 = vmatpush.msra.mxu0 0.0
    %142 = vmatpush.msra.mxu0 0.0
    %143 = vmatpush.msra.mxu0 0.0
    %144 = vmatpush.msra.mxu0 0.0
    %145 = vmatpush.msra.mxu0 0.0
    %146 = vmatpush.msra.mxu0 0.0
    %147 = vmatpush.msra.mxu0 0.0
    %148 = vmatpush.msra.mxu0 0.0
    %149 = vmatpush.msra.mxu0 0.0
    %150 = vmatpush.msra.mxu0 0.0
    %151 = vmatpush.msra.mxu0 %v131
    %152 = vmatmul.f32.gmra.mxu0 %v134
    %v153 = vpop.f32.mrf.mxu0
    %v154 = vadd.f32 0.0, %v153
    %155 = vdwg.mxu0
    %156 = vmatpush.msra.mxu0 0.0
    %157 = vmatpush.msra.mxu0 0.0
    %158 = vmatpush.msra.mxu0 0.0
    %159 = vmatpush.msra.mxu0 0.0
    %160 = vmatpush.msra.mxu0 0.0
    %161 = vmatpush.msra.mxu0 0.0
    %162 = vmatpush.msra.mxu0 0.0
    %163 = vmatpush.msra.mxu0 0.0
    %164 = vmatpush.msra.mxu0 0.0
    %165 = vmatpush.msra.mxu0 0.0
    %166 = vmatpush.msra.mxu0 0.0
    %167 = vmatpush.msra.mxu0 0.0
    %168 = vmatpush.msra.mxu0 0.0
    %169 = vmatpush.msra.mxu0 0.0
    %170 = vmatpush.msra.mxu0 0.0
    %171 = vmatpush.msra.mxu0 %v132
    %172 = vmatmul.f32.gmra.mxu0 %v134
    %v173 = vpop.f32.mrf.mxu0
    %v174 = vadd.f32 0.0, %v173
    %175 = vdwg.mxu0
    %v176 = vmul.f32 %v32, %v154
    %v177 = vmul.f32 %v33, %v174
    %v178 = vld [vmem:[%s3] sm:$0xff]
    %v179 = vld [vmem:[%s3 + $0x8] sm:$0xff]
    %v180 = vld [vmem:[%s3 + $0x10] sm:$0xff]
    %v181 = vld [vmem:[%s3 + $0x18] sm:$0xff]
    %v182 = vld [vmem:[%s3 + $0x20] sm:$0xff]
    %v183 = vld [vmem:[%s3 + $0x28] sm:$0xff]
    %v184 = vld [vmem:[%s3 + $0x30] sm:$0xff]
    %v185 = vld [vmem:[%s3 + $0x38] sm:$0xff]
    %v186 = vld [vmem:[%s3 + $0x40] sm:$0xff]
    %v187 = vld [vmem:[%s3 + $0x48] sm:$0xff]
    %v188 = vld [vmem:[%s3 + $0x50] sm:$0xff]
    %v189 = vld [vmem:[%s3 + $0x58] sm:$0xff]
    %v190 = vld [vmem:[%s3 + $0x60] sm:$0xff]
    %v191 = vld [vmem:[%s3 + $0x68] sm:$0xff]
    %v192 = vld [vmem:[%s3 + $0x70] sm:$0xff]
    %v193 = vld [vmem:[%s3 + $0x78] sm:$0xff]
    %v194 = vld [vmem:[%s3 + $0x80] sm:$0xff]
    %v195 = vld [vmem:[%s3 + $0x88] sm:$0xff]
    %v196 = vld [vmem:[%s3 + $0x90] sm:$0xff]
    %v197 = vld [vmem:[%s3 + $0x98] sm:$0xff]
    %v198 = vld [vmem:[%s3 + $0xa0] sm:$0xff]
    %v199 = vld [vmem:[%s3 + $0xa8] sm:$0xff]
    %v200 = vld [vmem:[%s3 + $0xb0] sm:$0xff]
    %v201 = vld [vmem:[%s3 + $0xb8] sm:$0xff]
    %v202 = vld [vmem:[%s3 + $0xc0] sm:$0xff]
    %v203 = vld [vmem:[%s3 + $0xc8] sm:$0xff]
    %v204 = vld [vmem:[%s3 + $0xd0] sm:$0xff]
    %v205 = vld [vmem:[%s3 + $0xd8] sm:$0xff]
    %v206 = vld [vmem:[%s3 + $0xe0] sm:$0xff]
    %v207 = vld [vmem:[%s3 + $0xe8] sm:$0xff]
    %v208 = vld [vmem:[%s3 + $0xf0] sm:$0xff]
    %v209 = vld [vmem:[%s3 + $0xf8] sm:$0xff]
    %210 = vmatpush.msra.mxu0 %v193
    %211 = vmatpush.msra.mxu0 %v192
    %212 = vmatpush.msra.mxu0 %v191
    %213 = vmatpush.msra.mxu0 %v190
    %214 = vmatpush.msra.mxu0 %v189
    %215 = vmatpush.msra.mxu0 %v188
    %216 = vmatpush.msra.mxu0 %v187
    %217 = vmatpush.msra.mxu0 %v186
    %218 = vmatpush.msra.mxu0 %v185
    %219 = vmatpush.msra.mxu0 %v184
    %220 = vmatpush.msra.mxu0 %v183
    %221 = vmatpush.msra.mxu0 %v182
    %222 = vmatpush.msra.mxu0 %v181
    %223 = vmatpush.msra.mxu0 %v180
    %224 = vmatpush.msra.mxu0 %v179
    %225 = vmatpush.msra.mxu0 %v178
    %226 = vmatmul.f32.gmra.mxu0 %v176
    %v227 = vpop.f32.mrf.mxu0
    %v228 = vadd.f32 0.0, %v227
    %229 = vdwg.mxu0
    %230 = vmatpush.msra.mxu0 %v209
    %231 = vmatpush.msra.mxu0 %v208
    %232 = vmatpush.msra.mxu0 %v207
    %233 = vmatpush.msra.mxu0 %v206
    %234 = vmatpush.msra.mxu0 %v205
    %235 = vmatpush.msra.mxu0 %v204
    %236 = vmatpush.msra.mxu0 %v203
    %237 = vmatpush.msra.mxu0 %v202
    %238 = vmatpush.msra.mxu0 %v201
    %239 = vmatpush.msra.mxu0 %v200
    %240 = vmatpush.msra.mxu0 %v199
    %241 = vmatpush.msra.mxu0 %v198
    %242 = vmatpush.msra.mxu0 %v197
    %243 = vmatpush.msra.mxu0 %v196
    %244 = vmatpush.msra.mxu0 %v195
    %245 = vmatpush.msra.mxu0 %v194
    %246 = vmatmul.f32.gmra.mxu0 %v177
    %v247 = vpop.f32.mrf.mxu0
    %v248 = vadd.f32 %v228, %v247
    %249 = vdwg.mxu0
    %250 = vst [vmem:[#allocation5] sm:$0xff] %v248
    // Predicated region
    $region22: #{tpu_custom_call.1} parent=1 // pred_check
      _
    $region23: #{tpu_custom_call.1} parent=1 // pred_check_branch
      %252 = sbr.rel (0) target = $region25
    $region24: #{tpu_custom_call.1} parent=1 // pred_region
      %254 = vsyncadd [#allocation4], 0
      %s256 = sshll.u32 [#allocation5], 4
      %s257 = int_to_ptr.vmem [resolvable:$true] %s256
      %s258 = sshll.u32 %s4, 4
      %s259 = int_to_ptr.hbm [resolvable:$true] %s258
      %261 = dma.vmem_to_hbm [thread:$0]  %s257, 128, %s259, [#allocation4]
    $region25: #{tpu_custom_call.1} parent=1 // pred_fallthru
      _
    // Predicated region
    $region26: #{tpu_custom_call.1} parent=1 // pred_check
      _
    $region27: #{tpu_custom_call.1} parent=1 // pred_check_branch
      %263 = sbr.rel (0) target = $region29
    $region28: #{tpu_custom_call.1} parent=1 // pred_region
      %265 = dma.done [#allocation4], 128
    $region29: #{tpu_custom_call.1} parent=1 // pred_fallthru
      _
    %266 = vsyncpa [#allocation3], 1
    %267 = vsyncpa [#allocation4], 1

</llo_original>
